<compile_context>
chip_gen: v5e
topology: v5e:2x2
jax: 0.10.0
libtpu: 0.0.40
codegen_flags: <defaults>
</compile_context>

<pallas_src>
import jax
import jax.numpy as jnp
from jax.experimental import pallas as pl
from jax.experimental.pallas import tpu as pltpu


def _entropy_stats_kernel(x_ref, m_out, s_out, t_out, m_acc, s_acc, t_acc):
    """Online softmax statistics per (sub-)row.

    Grid: (row_tiles [parallel], n_tiles [arbitrary, reduction]).
    x_ref:   (RB, TN) input tile (native dtype, upcast here).
    *_out:   (RB, 1) f32 final stats, written only on the last N tile.
    *_acc:   (RB, 1) f32 VMEM scratch accumulators.
    """
    j = pl.program_id(1)

    x = x_ref[...].astype(jnp.float32)                 # (RB, TN)
    m_loc = jnp.max(x, axis=1, keepdims=True)          # (RB, 1)

    @pl.when(j == 0)
    def _init():
        # Initialize the running max from the first tile (avoids -inf arithmetic).
        m_acc[...] = m_loc
        s_acc[...] = jnp.zeros_like(s_acc)
        t_acc[...] = jnp.zeros_like(t_acc)

    m_old = m_acc[...]
    s_old = s_acc[...]
    t_old = t_acc[...]

    m_new = jnp.maximum(m_old, m_loc)                  # (RB, 1)
    alpha = jnp.exp(m_old - m_new)                     # rescale old stats (<= 1)

    z = x - m_new                                      # (RB, TN), <= 0
    e = jnp.exp(z)                                     # only per-element transcendental
    s_loc = jnp.sum(e, axis=1, keepdims=True)          # (RB, 1)
    t_loc = jnp.sum(e * z, axis=1, keepdims=True)      # (RB, 1)

    s_acc[...] = alpha * s_old + s_loc
    t_acc[...] = alpha * (t_old + (m_old - m_new) * s_old) + t_loc
    m_acc[...] = m_new

    @pl.when(j == pl.num_programs(1) - 1)
    def _finalize():
        m_out[...] = m_acc[...]
        s_out[...] = s_acc[...]
        t_out[...] = t_acc[...]


def _choose_fold(b, n):
    """Pick k so that (B,N)->(B*k, N/k) gives sublane-dense rows & 128-aligned lanes."""
    for k in (1, 2, 4, 8):
        if (b * k) % 8 == 0 and n % k == 0 and (n // k) % 128 == 0:
            return k
    for k in (1, 2, 4, 8):  # at least keep the lane dim 128-aligned
        if n % k == 0 and (n // k) % 128 == 0:
            return k
    return 1


def _pick_tile(total, preferred, align):
    """Largest divisor of `total` that is <= preferred and a multiple of `align`.
    Falls back to the full dimension (always legal for a BlockSpec)."""
    best = None
    d = align
    cap = min(total, preferred)
    while d <= cap:
        if total % d == 0:
            best = d
        d += align
    return best if best is not None else total


def entropy_loss(x, *, max_row_tile=256, max_lane_tile=2048):
    """x: (B, C, H, W) (or any (B, ...)) array, native dtype. Returns f32 scalar."""
    b = x.shape[0]
    flat = x.reshape(b, -1)                # no dtype cast: stream native dtype
    n = flat.shape[1]

    # Free row-major view to a sublane-dense slab.
    k = _choose_fold(b, n)
    r, ns = b * k, n // k
    flat = flat.reshape(r, ns)

    rb = _pick_tile(r, max_row_tile, 8)    # row tile (sublane-aligned or full dim)
    tn = _pick_tile(ns, max_lane_tile, 128)  # lane tile (128-aligned or full dim)
    grid = (r // rb, ns // tn)             # reduction axis (N tiles) is last

    stat = jax.ShapeDtypeStruct((r, 1), jnp.float32)
    m, s, t = pl.pallas_call(
        _entropy_stats_kernel,
        out_shape=(stat, stat, stat),
        grid_spec=pltpu.PrefetchScalarGridSpec(
            num_scalar_prefetch=0,
            grid=grid,
            in_specs=[pl.BlockSpec((rb, tn), lambda i, j: (i, j))],
            out_specs=[
                pl.BlockSpec((rb, 1), lambda i, j: (i, 0)),
                pl.BlockSpec((rb, 1), lambda i, j: (i, 0)),
                pl.BlockSpec((rb, 1), lambda i, j: (i, 0)),
            ],
            scratch_shapes=[pltpu.VMEM((rb, 1), jnp.float32) for _ in range(3)],
        ),
        compiler_params=pltpu.CompilerParams(
            dimension_semantics=("parallel", "arbitrary"),
        ),
    )(flat)

    # Combine the k fold sub-rows of each original row (tiny (B, k) arrays) and
    # take the batch mean.  entropy = log(s_row) - t_row / s_row.
    m = m.reshape(b, k)
    s = s.reshape(b, k)
    t = t.reshape(b, k)
    m_row = jnp.max(m, axis=1, keepdims=True)
    w = jnp.exp(m - m_row)
    s_row = jnp.sum(w * s, axis=1)
    t_row = jnp.sum(w * (t + (m - m_row) * s), axis=1)
    ent = jnp.log(s_row) - t_row / s_row
    return jnp.mean(ent)


if __name__ == "__main__":
    key = jax.random.PRNGKey(0)
    x = jax.random.normal(key, (2, 4, 16, 16), dtype=jnp.float32)  # NCHW

    loss = entropy_loss(x)
    jax.block_until_ready(loss)

    # Pure-JAX references.
    flat = x.reshape(x.shape[0], -1).astype(jnp.float32)
    n = flat.shape[1]
    eps = jnp.finfo(jnp.float32).eps
    p = jax.nn.softmax(flat, axis=1)
    # Exact-math entropy (no eps) -- the kernel's algebraic target.
    ref_exact = jnp.mean(-jnp.sum(jnp.where(p > 0, p * jnp.log(p), 0.0), axis=1))
    # PyTorch semantics (eps inside the log); differs from ref_exact by <= N*eps.
    ref_torch = jnp.mean(-jnp.sum(p * jnp.log(p + eps), axis=1))

    assert jnp.allclose(loss, ref_exact, rtol=1e-5, atol=1e-5), (loss, ref_exact)
    assert jnp.allclose(loss, ref_torch, rtol=1e-5, atol=2.0 * n * eps), (loss, ref_torch)

    print("KERNEL_OK")
</pallas_src>

<mosaic_0001>
module attributes {stable_mosaic.version = 11 : i64} {
  func.func @_entropy_stats_kernel(%arg0: i32, %arg1: i32, %arg2: memref<8x256xf32, #tpu.memory_space<vmem>>, %arg3: memref<8x1xf32, #tpu.memory_space<vmem>>, %arg4: memref<8x1xf32, #tpu.memory_space<vmem>>, %arg5: memref<8x1xf32, #tpu.memory_space<vmem>>, %arg6: memref<8x1xf32, #tpu.memory_space<vmem>>, %arg7: memref<8x1xf32, #tpu.memory_space<vmem>>, %arg8: memref<8x1xf32, #tpu.memory_space<vmem>>) attributes {dimension_semantics = [#tpu.dimension_semantics<parallel>, #tpu.dimension_semantics<arbitrary>], iteration_bounds = array<i64: 1, 1>, scalar_prefetch = 0 : i64, scratch_operands = 3 : i64, tpu.core_type = #tpu.core_type<tc>, window_params = [{transform_indices = @transform_0, window_bounds = array<i64: 8, 256>}, {transform_indices = @transform_1, window_bounds = array<i64: 8, 1>}, {transform_indices = @transform_2, window_bounds = array<i64: 8, 1>}, {transform_indices = @transform_3, window_bounds = array<i64: 8, 1>}]} {
    %c0 = arith.constant 0 : index
    %c0_0 = arith.constant 0 : index
    %0 = vector.load %arg2[%c0, %c0_0] : memref<8x256xf32, #tpu.memory_space<vmem>>, vector<8x256xf32>
    %cst = arith.constant dense<0xFF800000> : vector<8xf32>
    %1 = vector.multi_reduction <maximumf>, %0, %cst [1] : vector<8x256xf32> to vector<8xf32>
    %2 = vector.shape_cast %1 : vector<8xf32> to vector<8x1xf32>
    %c0_i32 = arith.constant 0 : i32
    %3 = arith.cmpi eq, %arg1, %c0_i32 : i32
    %4 = arith.extui %3 : i1 to i32
    %c0_i32_1 = arith.constant 0 : i32
    %5 = arith.cmpi ne, %4, %c0_i32_1 : i32
    scf.if %5 {
      %c0_18 = arith.constant 0 : index
      %c0_19 = arith.constant 0 : index
      %33 = vector.load %arg6[%c0_18, %c0_19] : memref<8x1xf32, #tpu.memory_space<vmem>>, vector<8x1xf32>
      tpu.vector_store %arg6[%c0_18, %c0_19], %2 {strides = array<i32>} : memref<8x1xf32, #tpu.memory_space<vmem>>, vector<8x1xf32>,
      %cst_20 = arith.constant 0.000000e+00 : f32
      %34 = vector.broadcast %cst_20 : f32 to vector<8x1xf32>
      %c0_21 = arith.constant 0 : index
      %c0_22 = arith.constant 0 : index
      %35 = vector.load %arg7[%c0_21, %c0_22] : memref<8x1xf32, #tpu.memory_space<vmem>>, vector<8x1xf32>
      tpu.vector_store %arg7[%c0_21, %c0_22], %34 {strides = array<i32>} : memref<8x1xf32, #tpu.memory_space<vmem>>, vector<8x1xf32>,
      %cst_23 = arith.constant 0.000000e+00 : f32
      %36 = vector.broadcast %cst_23 : f32 to vector<8x1xf32>
      %c0_24 = arith.constant 0 : index
      %c0_25 = arith.constant 0 : index
      %37 = vector.load %arg8[%c0_24, %c0_25] : memref<8x1xf32, #tpu.memory_space<vmem>>, vector<8x1xf32>
      tpu.vector_store %arg8[%c0_24, %c0_25], %36 {strides = array<i32>} : memref<8x1xf32, #tpu.memory_space<vmem>>, vector<8x1xf32>,
    } else {
    }
    %c0_2 = arith.constant 0 : index
    %c0_3 = arith.constant 0 : index
    %6 = vector.load %arg6[%c0_2, %c0_3] : memref<8x1xf32, #tpu.memory_space<vmem>>, vector<8x1xf32>
    %c0_4 = arith.constant 0 : index
    %c0_5 = arith.constant 0 : index
    %7 = vector.load %arg7[%c0_4, %c0_5] : memref<8x1xf32, #tpu.memory_space<vmem>>, vector<8x1xf32>
    %c0_6 = arith.constant 0 : index
    %c0_7 = arith.constant 0 : index
    %8 = vector.load %arg8[%c0_6, %c0_7] : memref<8x1xf32, #tpu.memory_space<vmem>>, vector<8x1xf32>
    %9 = arith.maximumf %6, %2 : vector<8x1xf32>
    %10 = arith.subf %6, %9 : vector<8x1xf32>
    %11 = math.exp %10 : vector<8x1xf32>
    %12 = vector.broadcast %9 : vector<8x1xf32> to vector<8x256xf32>
    %13 = arith.subf %0, %12 : vector<8x256xf32>
    %14 = math.exp %13 : vector<8x256xf32>
    %cst_8 = arith.constant dense<0.000000e+00> : vector<8xf32>
    %15 = vector.multi_reduction <add>, %14, %cst_8 [1] : vector<8x256xf32> to vector<8xf32>
    %16 = vector.shape_cast %15 : vector<8xf32> to vector<8x1xf32>
    %17 = arith.mulf %14, %13 : vector<8x256xf32>
    %cst_9 = arith.constant dense<0.000000e+00> : vector<8xf32>
    %18 = vector.multi_reduction <add>, %17, %cst_9 [1] : vector<8x256xf32> to vector<8xf32>
    %19 = vector.shape_cast %18 : vector<8xf32> to vector<8x1xf32>
    %20 = arith.mulf %11, %7 : vector<8x1xf32>
    %21 = arith.addf %20, %16 : vector<8x1xf32>
    %c0_10 = arith.constant 0 : index
    %c0_11 = arith.constant 0 : index
    %22 = vector.load %arg7[%c0_10, %c0_11] : memref<8x1xf32, #tpu.memory_space<vmem>>, vector<8x1xf32>
    tpu.vector_store %arg7[%c0_10, %c0_11], %21 {strides = array<i32>} : memref<8x1xf32, #tpu.memory_space<vmem>>, vector<8x1xf32>,
    %23 = arith.subf %6, %9 : vector<8x1xf32>
    %24 = arith.mulf %23, %7 : vector<8x1xf32>
    %25 = arith.addf %8, %24 : vector<8x1xf32>
    %26 = arith.mulf %11, %25 : vector<8x1xf32>
    %27 = arith.addf %26, %19 : vector<8x1xf32>
    %c0_12 = arith.constant 0 : index
    %c0_13 = arith.constant 0 : index
    %28 = vector.load %arg8[%c0_12, %c0_13] : memref<8x1xf32, #tpu.memory_space<vmem>>, vector<8x1xf32>
    tpu.vector_store %arg8[%c0_12, %c0_13], %27 {strides = array<i32>} : memref<8x1xf32, #tpu.memory_space<vmem>>, vector<8x1xf32>,
    %c0_14 = arith.constant 0 : index
    %c0_15 = arith.constant 0 : index
    %29 = vector.load %arg6[%c0_14, %c0_15] : memref<8x1xf32, #tpu.memory_space<vmem>>, vector<8x1xf32>
    tpu.vector_store %arg6[%c0_14, %c0_15], %9 {strides = array<i32>} : memref<8x1xf32, #tpu.memory_space<vmem>>, vector<8x1xf32>,
    %c0_i32_16 = arith.constant 0 : i32
    %30 = arith.cmpi eq, %arg1, %c0_i32_16 : i32
    %31 = arith.extui %30 : i1 to i32
    %c0_i32_17 = arith.constant 0 : i32
    %32 = arith.cmpi ne, %31, %c0_i32_17 : i32
    scf.if %32 {
      %c0_18 = arith.constant 0 : index
      %c0_19 = arith.constant 0 : index
      %33 = vector.load %arg6[%c0_18, %c0_19] : memref<8x1xf32, #tpu.memory_space<vmem>>, vector<8x1xf32>
      %c0_20 = arith.constant 0 : index
      %c0_21 = arith.constant 0 : index
      %34 = vector.load %arg3[%c0_20, %c0_21] : memref<8x1xf32, #tpu.memory_space<vmem>>, vector<8x1xf32>
      tpu.vector_store %arg3[%c0_20, %c0_21], %33 {strides = array<i32>} : memref<8x1xf32, #tpu.memory_space<vmem>>, vector<8x1xf32>,
      %c0_22 = arith.constant 0 : index
      %c0_23 = arith.constant 0 : index
      %35 = vector.load %arg7[%c0_22, %c0_23] : memref<8x1xf32, #tpu.memory_space<vmem>>, vector<8x1xf32>
      %c0_24 = arith.constant 0 : index
      %c0_25 = arith.constant 0 : index
      %36 = vector.load %arg4[%c0_24, %c0_25] : memref<8x1xf32, #tpu.memory_space<vmem>>, vector<8x1xf32>
      tpu.vector_store %arg4[%c0_24, %c0_25], %35 {strides = array<i32>} : memref<8x1xf32, #tpu.memory_space<vmem>>, vector<8x1xf32>,
      %c0_26 = arith.constant 0 : index
      %c0_27 = arith.constant 0 : index
      %37 = vector.load %arg8[%c0_26, %c0_27] : memref<8x1xf32, #tpu.memory_space<vmem>>, vector<8x1xf32>
      %c0_28 = arith.constant 0 : index
      %c0_29 = arith.constant 0 : index
      %38 = vector.load %arg5[%c0_28, %c0_29] : memref<8x1xf32, #tpu.memory_space<vmem>>, vector<8x1xf32>
      tpu.vector_store %arg5[%c0_28, %c0_29], %37 {strides = array<i32>} : memref<8x1xf32, #tpu.memory_space<vmem>>, vector<8x1xf32>,
    } else {
    }
    return
  }
  func.func @transform_0(%arg0: i32, %arg1: i32) -> (i32, i32) {
    %c0_i32 = arith.constant 0 : i32
    return %arg0, %arg1 : i32, i32
  }
  func.func @transform_1(%arg0: i32, %arg1: i32) -> (i32, i32) {
    %c0_i32 = arith.constant 0 : i32
    %c0_i32_0 = arith.constant 0 : i32
    return %arg0, %c0_i32 : i32, i32
  }
  func.func @transform_2(%arg0: i32, %arg1: i32) -> (i32, i32) {
    %c0_i32 = arith.constant 0 : i32
    %c0_i32_0 = arith.constant 0 : i32
    return %arg0, %c0_i32 : i32, i32
  }
  func.func @transform_3(%arg0: i32, %arg1: i32) -> (i32, i32) {
    %c0_i32 = arith.constant 0 : i32
    %c0_i32_0 = arith.constant 0 : i32
    return %arg0, %c0_i32 : i32, i32
  }
}

</mosaic_0001>

<llo_original>
// kernel: tpu_custom_call.1
$region0: #{tpu_custom_call.1}
  #allocation0 [shape = 'u32[]', space=smem, size = 0x4, offset = 0x4, fixed_abs, tag = 'smem constant byte address 0x4 - core index']
  #allocation1 [shape = 'u32[72,128]{1,0:T(1,128)}', space=vmem, size = 0x9000, scoped, tag = 'internal scratch']
  #allocation2 [shape = 'f32[8,1]{1,0:T(8,128)}', space=vmem, size = 0x1000, scoped, tag = 'scratch operand']
  #allocation3 [shape = 'f32[8,1]{1,0:T(8,128)}', space=vmem, size = 0x1000, scoped, tag = 'scratch operand']
  #allocation4 [shape = 'f32[8,1]{1,0:T(8,128)}', space=vmem, size = 0x1000, scoped, tag = 'scratch operand']
  %s0 = inlined_call_operand.hbm [shape: f32[8,256], index: 0, kind: input, shape index: {}]
  %s1 = inlined_call_operand.vmem [shape: f32[8,1], index: 1, kind: output, shape index: {0}]
  %s2 = inlined_call_operand.vmem [shape: f32[8,1], index: 2, kind: output, shape index: {1}]
  %s3 = inlined_call_operand.vmem [shape: f32[8,1], index: 3, kind: output, shape index: {2}]
  %4 = xla_tuple %s1, %s2, %s3
  %s5 = sld [smem:[#allocation0]]
  $region42: #{tpu_custom_call.1} parent=0
    _
  %s7 = ssub.s32 1, %s5
  %s8 = scalar_select 0, %s7, %s5
  $region1: #{tpu_custom_call.1} parent=0
    #allocation5 [shape = 'u8[8192]{0}', space=vmem, size = 0x2000, scoped, tag = 'input window, operand 0, single buffered']
    #allocation6 [shape = 's32[1]{0}', space=sflag, size = 0x4, scoped, tag = 'scoped memory for tpu_custom_call.1']
    %9 = vsyncpa [#allocation6], 0
    // Predicated region
    $region2: #{tpu_custom_call.1} parent=1 // pred_check
      _
    $region3: #{tpu_custom_call.1} parent=1 // pred_check_branch
      %11 = sbr.rel (0) target = $region5
    $region4: #{tpu_custom_call.1} parent=1 // pred_region
      %13 = vsyncadd [#allocation6], 0
      %s15 = sshll.u32 %s0, 4
      %s16 = int_to_ptr.hbm [resolvable:$true] %s15
      %s17 = sshll.u32 [#allocation5], 4
      %s18 = int_to_ptr.vmem [resolvable:$true] %s17
      %20 = dma.hbm_to_vmem [thread:$0]  %s16, 256, %s18, [#allocation6]
    $region5: #{tpu_custom_call.1} parent=1 // pred_fallthru
      _
    // Predicated region
    $region6: #{tpu_custom_call.1} parent=1 // pred_check
      _
    $region7: #{tpu_custom_call.1} parent=1 // pred_check_branch
      %22 = sbr.rel (0) target = $region9
    $region8: #{tpu_custom_call.1} parent=1 // pred_region
      %24 = dma.done [#allocation6], 256
    $region9: #{tpu_custom_call.1} parent=1 // pred_fallthru
      _
    %v25 = vld [vmem:[#allocation5] sm:$0xff]
    %v26 = vld [vmem:[#allocation5 + $0x8] sm:$0xff]
    %v27 = vmax.f32 %v25, %v26
    %28 = vmax.xlane.f32.xlu0 %v27
    %v29 = vpop.xlane.xlu0 %28
    %p30 = scmp.eq.s32.totalorder 0, 0
    // Predicated region
    $region10: #{tpu_custom_call.1} parent=1 // pred_check
      %p31 = pneg %p30
    $region11: #{tpu_custom_call.1} parent=1 // pred_check_branch
      %33 = sbr.rel (%p31) target = $region13
    $region12: #{tpu_custom_call.1} parent=1 // pred_region
      %vm34 = vcmask 7168
      %35 = vst.msk [vmem:[#allocation2] sm:$0xff] %vm34, %v29
      %36 = vst.msk [vmem:[#allocation3] sm:$0xff] %vm34, 0.0
      %37 = vst.msk [vmem:[#allocation4] sm:$0xff] %vm34, 0.0
    $region13: #{tpu_custom_call.1} parent=1 // pred_fallthru
      _
    %v38 = vld [vmem:[#allocation2] sm:$0xff]
    %v39 = vld [vmem:[#allocation3] sm:$0xff]
    %v40 = vld [vmem:[#allocation4] sm:$0xff]
    %v41 = vmax.f32 %v38, %v29
    %v42 = vsub.f32 %v38, %v41
    %v43 = vmul.f32 %v42, 1.442695
    %v44 = vpow.pop %v43
    %46 = vset.pattern.permute.xlu0 0
    %47 = vperm.xlu0 %46, %v41
    %v48 = vpop.permute.xlu0 %47
    %v50 = vsub.f32 %v25, %v48
    %v51 = vsub.f32 %v26, %v48
    %v52 = vmul.f32 %v50, 1.442695
    %v53 = vpow.pop %v52
    %v54 = vmul.f32 %v51, 1.442695
    %v55 = vpow.pop %v54
    %v56 = vadd.f32 %v53, %v55
    %57 = vadd.xlane.f32.xlu0 %v56
    %v58 = vpop.xlane.xlu0 %57
    %v59 = vmul.f32 %v53, %v50
    %v60 = vmul.f32 %v55, %v51
    %v61 = vadd.f32 %v59, %v60
    %62 = vadd.xlane.f32.xlu0 %v61
    %v63 = vpop.xlane.xlu0 %62
    %v64 = vmul.f32 %v44, %v39
    %v65 = vadd.f32 %v64, %v58
    %vm66 = vcmask 7168
    %67 = vst.msk [vmem:[#allocation3] sm:$0xff] %vm66, %v65
    %v68 = vmul.f32 %v42, %v39
    %v69 = vadd.f32 %v40, %v68
    %v70 = vmul.f32 %v44, %v69
    %v71 = vadd.f32 %v70, %v63
    %72 = vst.msk [vmem:[#allocation4] sm:$0xff] %vm66, %v71
    %73 = vst.msk [vmem:[#allocation2] sm:$0xff] %vm66, %v41
    // Predicated region
    $region14: #{tpu_custom_call.1} parent=1 // pred_check
      %p74 = pneg %p30
    $region15: #{tpu_custom_call.1} parent=1 // pred_check_branch
      %76 = sbr.rel (%p74) target = $region17
    $region16: #{tpu_custom_call.1} parent=1 // pred_region
      %v77 = vld [vmem:[#allocation2] sm:$0xff]
      %78 = vst.msk [vmem:[%s1] sm:$0xff] %vm66, %v77
      %v79 = vld [vmem:[#allocation3] sm:$0xff]
      %80 = vst.msk [vmem:[%s2] sm:$0xff] %vm66, %v79
      %v81 = vld [vmem:[#allocation4] sm:$0xff]
      %82 = vst.msk [vmem:[%s3] sm:$0xff] %vm66, %v81
    $region17: #{tpu_custom_call.1} parent=1 // pred_fallthru
      _
    // Predicated region
    $region18: #{tpu_custom_call.1} parent=1 // pred_check
      _
    $region19: #{tpu_custom_call.1} parent=1 // pred_check_branch
      %84 = sbr.rel (0) target = $region21
    $region20: #{tpu_custom_call.1} parent=1 // pred_region
      _
    $region21: #{tpu_custom_call.1} parent=1 // pred_fallthru
      _
    // Predicated region
    $region22: #{tpu_custom_call.1} parent=1 // pred_check
      _
    $region23: #{tpu_custom_call.1} parent=1 // pred_check_branch
      %86 = sbr.rel (0) target = $region25
    $region24: #{tpu_custom_call.1} parent=1 // pred_region
      _
    $region25: #{tpu_custom_call.1} parent=1 // pred_fallthru
      _
    // Predicated region
    $region26: #{tpu_custom_call.1} parent=1 // pred_check
      _
    $region27: #{tpu_custom_call.1} parent=1 // pred_check_branch
      %88 = sbr.rel (0) target = $region29
    $region28: #{tpu_custom_call.1} parent=1 // pred_region
      _
    $region29: #{tpu_custom_call.1} parent=1 // pred_fallthru
      _
    // Predicated region
    $region30: #{tpu_custom_call.1} parent=1 // pred_check
      _
    $region31: #{tpu_custom_call.1} parent=1 // pred_check_branch
      %90 = sbr.rel (0) target = $region33
    $region32: #{tpu_custom_call.1} parent=1 // pred_region
      _
    $region33: #{tpu_custom_call.1} parent=1 // pred_fallthru
      _
    // Predicated region
    $region34: #{tpu_custom_call.1} parent=1 // pred_check
      _
    $region35: #{tpu_custom_call.1} parent=1 // pred_check_branch
      %92 = sbr.rel (0) target = $region37
    $region36: #{tpu_custom_call.1} parent=1 // pred_region
      _
    $region37: #{tpu_custom_call.1} parent=1 // pred_fallthru
      _
    // Predicated region
    $region38: #{tpu_custom_call.1} parent=1 // pred_check
      _
    $region39: #{tpu_custom_call.1} parent=1 // pred_check_branch
      %94 = sbr.rel (0) target = $region41
    $region40: #{tpu_custom_call.1} parent=1 // pred_region
      _
    $region41: #{tpu_custom_call.1} parent=1 // pred_fallthru
      _
    %95 = vsyncpa [#allocation6], 1

</llo_original>
